<compile_context>
chip_gen: v7x
topology: tpu7x:2x2x1
jax: 0.10.0
libtpu: 0.0.40
codegen_flags: <defaults>
</compile_context>

<pallas_src>
import functools

import jax
import jax.numpy as jnp
from jax.experimental import pallas as pl
from jax.experimental.pallas import tpu as pltpu


def _cls_mdca_kernel(logits_ref, tgt_ref, conf_ref, focal_ref, *,
                     gamma, batch, tile_b, blocks_per_slice, masked):
    """One (tile_b, C) batch slab: accumulate per-slice softmax column sums and
    the per-slice focal-loss sum into resident output blocks."""
    s = pl.program_id(0)   # slice (TensorCore shard on v7x)
    i = pl.program_id(1)   # block within the slice (reduction axis)

    @pl.when(i == 0)
    def _init():
        conf_ref[...] = jnp.zeros_like(conf_ref)
        focal_ref[...] = jnp.zeros_like(focal_ref)

    x = logits_ref[...].astype(jnp.float32)               # (TB, C)
    t = tgt_ref[...]                                      # (TB, 1) int32
    tb, c = x.shape

    if masked:
        # Row-validity mask for the ragged last block of the batch.
        row0 = (s * blocks_per_slice + i) * tile_b
        row_ids = row0 + jax.lax.broadcasted_iota(jnp.int32, (tb, 1), 0)
        valid = row_ids < batch                           # (TB, 1) bool
        validf = valid.astype(jnp.float32)
        # Neutralize padded rows before any transcendental math (avoids NaN/Inf
        # from garbage pad data).
        x = jnp.where(valid, x, 0.0)

    # Stable softmax pieces (no full log_softmax temporary).
    m = jnp.max(x, axis=1, keepdims=True)                 # (TB, 1)
    z = x - m
    ez = jnp.exp(z)
    sez = jnp.sum(ez, axis=1, keepdims=True)              # (TB, 1)
    inv_row = 1.0 / sez                                   # exact per-row reciprocal
    if masked:
        inv_row = inv_row * validf                        # fold mask into (TB,1) scalar

    # One-hot of targets as a bool mask (gather replacement).
    class_ids = jax.lax.broadcasted_iota(jnp.int32, (tb, c), 1)
    onehot = class_ids == t                               # (TB, C) bool

    # FocalLoss: logpt = z[target] - log(sum exp z); pt = exp(logpt).
    zt = jnp.sum(jnp.where(onehot, z, 0.0), axis=1, keepdims=True)   # (TB, 1)
    logpt = zt - jnp.log(sez)
    pt = jnp.exp(logpt)
    one_m_pt = 1.0 - pt
    if gamma == 0.0:                                      # trace-time specialization
        w = jnp.ones_like(pt)
    elif gamma == 1.0:
        w = one_m_pt
    elif gamma == 2.0:
        w = one_m_pt * one_m_pt
    else:
        w = one_m_pt ** gamma
    focal = -(w * logpt)                                  # (TB, 1)
    if masked:
        focal = focal * validf

    # Accumulate per-slice partials into resident output blocks.
    conf_ref[...] += jnp.sum(ez * inv_row, axis=0, keepdims=True).reshape(1, 1, c)
    focal_ref[...] += jnp.sum(focal).reshape(1, 1, 1)


def _tpu_config():
    """Returns (num_slices, vmem_limit_bytes, per-block f32 working budget)."""
    kind = ""
    try:
        kind = jax.devices()[0].device_kind.lower()
    except Exception:
        pass
    if "v7" in kind:
        # v7x: 64 MiB physical VMEM per TensorCore, 2 TCs per chip.
        return 2, 48 * 1024 * 1024, 6 * 1024 * 1024
    # v5e / v6e (and unknown): 128 MiB physical VMEM, 1 TensorCore.
    return 1, 96 * 1024 * 1024, 8 * 1024 * 1024


def _choose_tile_b(batch, num_classes, budget_bytes):
    # Budget in f32 working precision and with lane padding (C rounds up to a
    # multiple of 128 in VMEM), so small-C cases don't overshoot VMEM.
    padded_c = ((num_classes + 127) // 128) * 128
    rows = budget_bytes // (padded_c * 4)
    rows = max(8, (rows // 8) * 8)
    return batch if rows >= batch else rows


def classification_and_mdca_loss(logits, targets, *, alpha=0.1, beta=1.0,
                                 gamma=1.0, tile_b=None, num_slices=None):
    """logits: [B, C] float (f32 or bf16), targets: [B] int. Returns scalar f32.

    `alpha` is accepted for API parity with the PyTorch module; the FL+MDCA
    path there does not use it either.
    """
    B, C = logits.shape
    targets = targets.astype(jnp.int32)
    targets2d = targets.reshape(B, 1)

    cfg_slices, vmem_limit, block_budget = _tpu_config()
    if num_slices is None:
        num_slices = cfg_slices
    if tile_b is None:
        tile_b = _choose_tile_b(B, C, block_budget)
    # Sanitize: tile must be a multiple of 8 sublanes or equal the full batch.
    tile_b = B if tile_b >= B else max(8, (tile_b // 8) * 8)

    nblocks = pl.cdiv(B, tile_b)
    num_slices = max(1, min(int(num_slices), nblocks))
    # Each slice must own an equal, in-bounds range of blocks: shrink the tile
    # a little if needed, otherwise fall back to a single slice.
    while num_slices > 1 and nblocks % num_slices != 0 and tile_b > 8:
        tile_b -= 8
        nblocks = pl.cdiv(B, tile_b)
    if num_slices > 1 and nblocks % num_slices != 0:
        num_slices = 1
    bps = nblocks // num_slices                    # blocks per slice
    masked = (nblocks * tile_b != B)               # ragged last block?

    kernel = functools.partial(
        _cls_mdca_kernel, gamma=float(gamma), batch=B, tile_b=tile_b,
        blocks_per_slice=bps, masked=masked)

    conf_p, focal_p = pl.pallas_call(
        kernel,
        out_shape=(
            jax.ShapeDtypeStruct((num_slices, 1, C), jnp.float32),  # softmax col sums
            jax.ShapeDtypeStruct((num_slices, 1, 1), jnp.float32),  # focal sums
        ),
        grid=(num_slices, bps),
        in_specs=[
            pl.BlockSpec((tile_b, C), lambda s, i: (s * bps + i, 0)),  # logits tile
            pl.BlockSpec((tile_b, 1), lambda s, i: (s * bps + i, 0)),  # targets tile
        ],
        out_specs=(
            pl.BlockSpec((1, 1, C), lambda s, i: (s, 0, 0)),  # resident per-slice
            pl.BlockSpec((1, 1, 1), lambda s, i: (s, 0, 0)),  # resident per-slice
        ),
        compiler_params=pltpu.CompilerParams(
            dimension_semantics=("parallel", "arbitrary"),
            vmem_limit_bytes=vmem_limit,
        ),
    )(logits, targets2d)

    # Cheap finalize in XLA: combine per-slice partials; per-class target
    # counts are trivial on B ints and were dropped from the kernel body.
    conf = jnp.sum(conf_p, axis=0).reshape(C)                      # sum_b softmax
    counts = jnp.sum(jax.nn.one_hot(targets, C, dtype=jnp.float32), axis=0)
    loss_cls = jnp.sum(focal_p) / B
    loss_cal = jnp.sum(jnp.abs(conf - counts)) / (B * C)
    return loss_cls + beta * loss_cal


def _reference(logits, targets, beta=1.0, gamma=1.0):
    x = logits.astype(jnp.float32)
    logsm = jax.nn.log_softmax(x, axis=1)
    sm = jax.nn.softmax(x, axis=1)
    B, C = x.shape
    logpt = jnp.take_along_axis(logsm, targets.reshape(-1, 1), axis=1).reshape(-1)
    pt = jnp.exp(logpt)
    loss_cls = jnp.mean(-((1.0 - pt) ** gamma) * logpt)
    onehot = jax.nn.one_hot(targets, C, dtype=jnp.float32)
    loss_cal = jnp.mean(jnp.abs(jnp.mean(sm, axis=0) - jnp.mean(onehot, axis=0)))
    return loss_cls + beta * loss_cal


if __name__ == "__main__":
    key = jax.random.PRNGKey(0)
    k1, k2 = jax.random.split(key)

    # 1) Default auto-tiling path (single block equal to the batch, mask-free).
    B, C = 20, 16
    logits = jax.random.normal(k1, (B, C), dtype=jnp.float32)
    targets = jax.random.randint(k2, (B,), 0, C, dtype=jnp.int32)
    loss = jax.block_until_ready(
        classification_and_mdca_loss(logits, targets, beta=1.0, gamma=1.0))
    ref = _reference(logits, targets, beta=1.0, gamma=1.0)
    assert jnp.allclose(loss, ref, atol=1e-5, rtol=1e-5), (loss, ref)

    # 2) Forced multi-block, two-slice ("parallel" axis) path, mask-free.
    B2, C2 = 32, 16
    k3, k4 = jax.random.split(k1)
    logits2 = jax.random.normal(k3, (B2, C2), dtype=jnp.float32)
    targets2 = jax.random.randint(k4, (B2,), 0, C2, dtype=jnp.int32)
    loss2 = jax.block_until_ready(classification_and_mdca_loss(
        logits2, targets2, beta=0.5, gamma=2.0, tile_b=8, num_slices=2))
    ref2 = _reference(logits2, targets2, beta=0.5, gamma=2.0)
    assert jnp.allclose(loss2, ref2, atol=1e-5, rtol=1e-5), (loss2, ref2)

    # 3) Forced ragged last block -> masked kernel variant.
    loss3 = jax.block_until_ready(classification_and_mdca_loss(
        logits, targets, beta=1.0, gamma=1.0, tile_b=8, num_slices=1))
    assert jnp.allclose(loss3, ref, atol=1e-5, rtol=1e-5), (loss3, ref)

    print("KERNEL_OK")
</pallas_src>

<mosaic_0001>
module attributes {stable_mosaic.version = 11 : i64} {
  func.func @_cls_mdca_kernel(%arg0: i32, %arg1: i32, %arg2: memref<20x16xf32, #tpu.memory_space<vmem>>, %arg3: memref<20x1xi32, #tpu.memory_space<vmem>>, %arg4: memref<1x1x16xf32, #tpu.memory_space<vmem>>, %arg5: memref<1x1x1xf32, #tpu.memory_space<vmem>>) attributes {dimension_semantics = [#tpu.dimension_semantics<parallel>, #tpu.dimension_semantics<arbitrary>], iteration_bounds = array<i64: 1, 1>, scalar_prefetch = 0 : i64, scratch_operands = 0 : i64, tpu.core_type = #tpu.core_type<tc>, window_params = [{transform_indices = @transform_0, window_bounds = array<i64: 20, 16>}, {transform_indices = @transform_1, window_bounds = array<i64: 20, 1>}, {transform_indices = @transform_2, window_bounds = array<i64: 1, 1, 16>}, {transform_indices = @transform_3, window_bounds = array<i64: 1, 1, 1>}]} {
    %c0_i32 = arith.constant 0 : i32
    %0 = arith.cmpi eq, %arg1, %c0_i32 : i32
    %1 = arith.extui %0 : i1 to i32
    %c0_i32_0 = arith.constant 0 : i32
    %2 = arith.cmpi ne, %1, %c0_i32_0 : i32
    scf.if %2 {
      %cst_24 = arith.constant 0.000000e+00 : f32
      %45 = vector.broadcast %cst_24 : f32 to vector<1x1x16xf32>
      %c0_25 = arith.constant 0 : index
      %c0_26 = arith.constant 0 : index
      %c0_27 = arith.constant 0 : index
      %46 = vector.load %arg4[%c0_25, %c0_26, %c0_27] : memref<1x1x16xf32, #tpu.memory_space<vmem>>, vector<1x1x16xf32>
      tpu.vector_store %arg4[%c0_25, %c0_26, %c0_27], %45 {strides = array<i32>} : memref<1x1x16xf32, #tpu.memory_space<vmem>>, vector<1x1x16xf32>,
      %cst_28 = arith.constant 0.000000e+00 : f32
      %47 = vector.broadcast %cst_28 : f32 to vector<1x1x1xf32>
      %c0_29 = arith.constant 0 : index
      %c0_30 = arith.constant 0 : index
      %c0_31 = arith.constant 0 : index
      %48 = vector.load %arg5[%c0_29, %c0_30, %c0_31] : memref<1x1x1xf32, #tpu.memory_space<vmem>>, vector<1x1x1xf32>
      tpu.vector_store %arg5[%c0_29, %c0_30, %c0_31], %47 {strides = array<i32>} : memref<1x1x1xf32, #tpu.memory_space<vmem>>, vector<1x1x1xf32>,
    } else {
    }
    %c0 = arith.constant 0 : index
    %c0_1 = arith.constant 0 : index
    %3 = vector.load %arg2[%c0, %c0_1] : memref<20x16xf32, #tpu.memory_space<vmem>>, vector<20x16xf32>
    %c0_2 = arith.constant 0 : index
    %c0_3 = arith.constant 0 : index
    %4 = vector.load %arg3[%c0_2, %c0_3] : memref<20x1xi32, #tpu.memory_space<vmem>>, vector<20x1xi32>
    %cst = arith.constant dense<0xFF800000> : vector<20xf32>
    %5 = vector.multi_reduction <maximumf>, %3, %cst [1] : vector<20x16xf32> to vector<20xf32>
    %6 = vector.shape_cast %5 : vector<20xf32> to vector<20x1xf32>
    %7 = vector.broadcast %6 : vector<20x1xf32> to vector<20x16xf32>
    %8 = arith.subf %3, %7 : vector<20x16xf32>
    %9 = math.exp %8 : vector<20x16xf32>
    %cst_4 = arith.constant dense<0.000000e+00> : vector<20xf32>
    %10 = vector.multi_reduction <add>, %9, %cst_4 [1] : vector<20x16xf32> to vector<20xf32>
    %11 = vector.shape_cast %10 : vector<20xf32> to vector<20x1xf32>
    %cst_5 = arith.constant 1.000000e+00 : f32
    %12 = vector.broadcast %cst_5 : f32 to vector<20x1xf32>
    %13 = arith.divf %12, %11 : vector<20x1xf32>
    %14 = tpu.iota {dimensions = array<i32: 1>} : vector<20x16xi32>
    %15 = vector.broadcast %4 : vector<20x1xi32> to vector<20x16xi32>
    %16 = arith.cmpi eq, %14, %15 : vector<20x16xi32>
    %cst_6 = arith.constant 0.000000e+00 : f32
    %17 = vector.broadcast %cst_6 : f32 to vector<20x16xf32>
    %18 = arith.select %16, %8, %17 : vector<20x16xi1>, vector<20x16xf32>
    %cst_7 = arith.constant dense<0.000000e+00> : vector<20xf32>
    %19 = vector.multi_reduction <add>, %18, %cst_7 [1] : vector<20x16xf32> to vector<20xf32>
    %20 = vector.shape_cast %19 : vector<20xf32> to vector<20x1xf32>
    %21 = math.log %11 : vector<20x1xf32>
    %22 = arith.subf %20, %21 : vector<20x1xf32>
    %23 = math.exp %22 : vector<20x1xf32>
    %cst_8 = arith.constant 1.000000e+00 : f32
    %24 = vector.broadcast %cst_8 : f32 to vector<20x1xf32>
    %25 = arith.subf %24, %23 : vector<20x1xf32>
    %26 = arith.mulf %25, %22 : vector<20x1xf32>
    %cst_9 = arith.constant 0.000000e+00 : f32
    %27 = vector.broadcast %cst_9 : f32 to vector<20x1xf32>
    %28 = arith.subf %27, %26 : vector<20x1xf32>
    %c0_10 = arith.constant 0 : index
    %c0_11 = arith.constant 0 : index
    %c0_12 = arith.constant 0 : index
    %29 = vector.load %arg4[%c0_10, %c0_11, %c0_12] : memref<1x1x16xf32, #tpu.memory_space<vmem>>, vector<1x1x16xf32>
    %30 = vector.broadcast %13 : vector<20x1xf32> to vector<20x16xf32>
    %31 = arith.mulf %9, %30 : vector<20x16xf32>
    %cst_13 = arith.constant dense<0.000000e+00> : vector<16xf32>
    %32 = vector.multi_reduction <add>, %31, %cst_13 [0] : vector<20x16xf32> to vector<16xf32>
    %33 = vector.shape_cast %32 : vector<16xf32> to vector<1x16xf32>
    %34 = vector.shape_cast %33 : vector<1x16xf32> to vector<1x1x16xf32>
    %35 = arith.addf %29, %34 : vector<1x1x16xf32>
    %c0_14 = arith.constant 0 : index
    %c0_15 = arith.constant 0 : index
    %c0_16 = arith.constant 0 : index
    %36 = vector.load %arg4[%c0_14, %c0_15, %c0_16] : memref<1x1x16xf32, #tpu.memory_space<vmem>>, vector<1x1x16xf32>
    tpu.vector_store %arg4[%c0_14, %c0_15, %c0_16], %35 {strides = array<i32>} : memref<1x1x16xf32, #tpu.memory_space<vmem>>, vector<1x1x16xf32>,
    %c0_17 = arith.constant 0 : index
    %c0_18 = arith.constant 0 : index
    %c0_19 = arith.constant 0 : index
    %37 = vector.load %arg5[%c0_17, %c0_18, %c0_19] : memref<1x1x1xf32, #tpu.memory_space<vmem>>, vector<1x1x1xf32>
    %38 = vector.shape_cast %28 : vector<20x1xf32> to vector<1x20x1xf32>
    %cst_20 = arith.constant dense<0.000000e+00> : vector<1xf32>
    %39 = vector.multi_reduction <add>, %38, %cst_20 [1, 2] : vector<1x20x1xf32> to vector<1xf32>
    %40 = vector.shape_cast %39 : vector<1xf32> to vector<1x1x1xf32>
    %41 = vector.extract %40[0, 0, 0] : f32 from vector<1x1x1xf32>
    %42 = vector.broadcast %41 : f32 to vector<1x1x1xf32>
    %43 = arith.addf %37, %42 : vector<1x1x1xf32>
    %c0_21 = arith.constant 0 : index
    %c0_22 = arith.constant 0 : index
    %c0_23 = arith.constant 0 : index
    %44 = vector.load %arg5[%c0_21, %c0_22, %c0_23] : memref<1x1x1xf32, #tpu.memory_space<vmem>>, vector<1x1x1xf32>
    tpu.vector_store %arg5[%c0_21, %c0_22, %c0_23], %43 {strides = array<i32>} : memref<1x1x1xf32, #tpu.memory_space<vmem>>, vector<1x1x1xf32>,
    return
  }
  func.func @transform_0(%arg0: i32, %arg1: i32) -> (i32, i32) {
    %c1_i32 = arith.constant 1 : i32
    %0 = arith.muli %arg0, %c1_i32 : i32
    %1 = arith.addi %0, %arg1 : i32
    %c0_i32 = arith.constant 0 : i32
    %c0_i32_0 = arith.constant 0 : i32
    return %1, %c0_i32 : i32, i32
  }
  func.func @transform_1(%arg0: i32, %arg1: i32) -> (i32, i32) {
    %c1_i32 = arith.constant 1 : i32
    %0 = arith.muli %arg0, %c1_i32 : i32
    %1 = arith.addi %0, %arg1 : i32
    %c0_i32 = arith.constant 0 : i32
    %c0_i32_0 = arith.constant 0 : i32
    return %1, %c0_i32 : i32, i32
  }
  func.func @transform_2(%arg0: i32, %arg1: i32) -> (i32, i32, i32) {
    %c0_i32 = arith.constant 0 : i32
    %c0_i32_0 = arith.constant 0 : i32
    %c0_i32_1 = arith.constant 0 : i32
    return %arg0, %c0_i32, %c0_i32_0 : i32, i32, i32
  }
  func.func @transform_3(%arg0: i32, %arg1: i32) -> (i32, i32, i32) {
    %c0_i32 = arith.constant 0 : i32
    %c0_i32_0 = arith.constant 0 : i32
    %c0_i32_1 = arith.constant 0 : i32
    return %arg0, %c0_i32, %c0_i32_0 : i32, i32, i32
  }
}

</mosaic_0001>

<llo_original>
// kernel: tpu_custom_call.1
$region0: #{tpu_custom_call.1}
  #allocation0 [shape = 'u32[]', space=smem, size = 0x4, offset = 0x4, fixed_abs, tag = 'smem constant byte address 0x4 - core index']
  #allocation1 [shape = 'u32[144,128]{1,0:T(1,128)}', space=vmem, size = 0x12000, scoped, tag = 'internal scratch']
  %s0 = inlined_call_operand.hbm [shape: f32[20,16], index: 0, kind: input, shape index: {}]
  %s1 = inlined_call_operand.hbm [shape: s32[20,1], index: 1, kind: input, shape index: {}]
  %s2 = inlined_call_operand.hbm [shape: f32[1,1,16], index: 2, kind: output, shape index: {0}]
  %s3 = inlined_call_operand.hbm [shape: f32[1,1,1], index: 3, kind: output, shape index: {1}]
  %4 = xla_tuple %s2, %s3
  %s5 = sld [smem:[#allocation0]]
  $region38: #{tpu_custom_call.1} parent=0
    _
  %s7 = ssub.s32 1, %s5
  %s8 = scalar_select 0, %s7, %s5
  $region1: #{tpu_custom_call.1} parent=0
    #allocation2 [shape = 'u8[12288]{0}', space=vmem, size = 0x3000, scoped, tag = 'input window, operand 0, single buffered']
    #allocation3 [shape = 's32[1]{0}', space=sflag, size = 0x4, scoped, tag = 'scoped memory for tpu_custom_call.1']
    #allocation4 [shape = 's32[1]{0}', space=sflag, size = 0x4, scoped, tag = 'scoped memory for tpu_custom_call.1']
    #allocation5 [shape = 'u8[12288]{0}', space=vmem, size = 0x3000, scoped, tag = 'input window, operand 1, single buffered']
    #allocation6 [shape = 's32[1]{0}', space=sflag, size = 0x4, scoped, tag = 'scoped memory for tpu_custom_call.1']
    #allocation7 [shape = 'u8[512]{0}', space=vmem, size = 0x400, scoped, tag = 'output window, operand 0, single buffered']
    #allocation8 [shape = 'u8[512]{0}', space=vmem, size = 0x400, scoped, tag = 'output window, operand 1, single buffered']
    #allocation9 [shape = 's32[1]{0}', space=sflag, size = 0x4, scoped, tag = 'scoped memory for tpu_custom_call.1']
    %9 = vsyncpa [#allocation3], 0
    %10 = vsyncpa [#allocation6], 0
    %11 = vsyncpa [#allocation4], 0
    %12 = vsyncpa [#allocation9], 0
    // Predicated region
    $region2: #{tpu_custom_call.1} parent=1 // pred_check
      _
    $region3: #{tpu_custom_call.1} parent=1 // pred_check_branch
      %14 = sbr.rel (0) target = $region5
    $region4: #{tpu_custom_call.1} parent=1 // pred_region
      %s15 = sadd.s32 0, 0
      %s16 = smul.u32 3, %s15
      %s18 = ssub.s32 384, 384
      %19 = vsyncadd [#allocation3], %s18
      %s20 = smul.addr %s16, 128
      %s21 = scalar_lea.hbm %s0, %s20
      %s22 = sshll.u32 [#allocation2], 4
      %s23 = int_to_ptr.vmem [resolvable:$true] %s22
      %28 = dma.hbm_to_vmem [thread:$0]  %s21, 384, %s23, [#allocation3], 128, 128, 8
    $region5: #{tpu_custom_call.1} parent=1 // pred_fallthru
      _
    // Predicated region
    $region6: #{tpu_custom_call.1} parent=1 // pred_check
      _
    $region7: #{tpu_custom_call.1} parent=1 // pred_check_branch
      %30 = sbr.rel (0) target = $region9
    $region8: #{tpu_custom_call.1} parent=1 // pred_region
      %s31 = sadd.s32 0, 0
      %s32 = smul.u32 3, %s31
      %s34 = ssub.s32 384, 384
      %35 = vsyncadd [#allocation6], %s34
      %s36 = smul.addr %s32, 128
      %s37 = scalar_lea.hbm %s1, %s36
      %s38 = sshll.u32 [#allocation5], 4
      %s39 = int_to_ptr.vmem [resolvable:$true] %s38
      %44 = dma.hbm_to_vmem [thread:$0]  %s37, 384, %s39, [#allocation6], 128, 128, 8
    $region9: #{tpu_custom_call.1} parent=1 // pred_fallthru
      _
    // Predicated region
    $region10: #{tpu_custom_call.1} parent=1 // pred_check
      _
    $region11: #{tpu_custom_call.1} parent=1 // pred_check_branch
      %46 = sbr.rel (0) target = $region13
    $region12: #{tpu_custom_call.1} parent=1 // pred_region
      %47 = dma.done [#allocation3], 384
    $region13: #{tpu_custom_call.1} parent=1 // pred_fallthru
      _
    // Predicated region
    $region14: #{tpu_custom_call.1} parent=1 // pred_check
      _
    $region15: #{tpu_custom_call.1} parent=1 // pred_check_branch
      %49 = sbr.rel (0) target = $region17
    $region16: #{tpu_custom_call.1} parent=1 // pred_region
      %50 = dma.done [#allocation6], 384
    $region17: #{tpu_custom_call.1} parent=1 // pred_fallthru
      _
    %s51 = sadd.s32 0, 0
    %s52 = smul.u32 3, %s51
    %s53 = sadd.s32 0, 0
    %s54 = smul.u32 3, %s53
    %p55 = scmp.eq.s32.totalorder 0, 0
    // Predicated region
    $region18: #{tpu_custom_call.1} parent=1 // pred_check
      %p56 = pneg %p55
    $region19: #{tpu_custom_call.1} parent=1 // pred_check_branch
      %58 = sbr.rel (%p56) target = $region21
    $region20: #{tpu_custom_call.1} parent=1 // pred_region
      %vm59 = vcmask 122880
      %60 = vst.msk [vmem:[#allocation7] sm:$0x1] %vm59, 0.0
      %vm61 = vcmask 0
      %62 = vst.msk [vmem:[#allocation8] sm:$0x1] %vm61, 0.0
    $region21: #{tpu_custom_call.1} parent=1 // pred_fallthru
      _
    %v63 = vld [vmem:[#allocation2] sm:$0xff]
    %v64 = vld [vmem:[#allocation2 + $0x8] sm:$0xff]
    %v65 = vld [vmem:[#allocation2 + $0x10] sm:$0xf]
    %v66 = vld [vmem:[#allocation5] sm:$0xff]
    %v67 = vld [vmem:[#allocation5 + $0x8] sm:$0xff]
    %v68 = vld [vmem:[#allocation5 + $0x10] sm:$0xf]
    %vm69 = vcmask 130048
    %v70 = vsel %vm69, %v63, -inf
    %71 = vmax.xlane.f32.xlu0 %v70
    %v72 = vpop.xlane.xlu0 %71
    %v73 = vsel %vm69, %v64, -inf
    %74 = vmax.xlane.f32.xlu0 %v73
    %v75 = vpop.xlane.xlu0 %74
    %vm76 = vcmask 125952
    %v77 = vsel %vm76, %v65, -inf
    %78 = vmax.xlane.f32.xlu0 %v77
    %v79 = vpop.xlane.xlu0 %78
    %v80 = vsub.f32 %v63, %v72
    %v81 = vsub.f32 %v64, %v75
    %v82 = vsub.f32 %v65, %v79
    %v83 = vmul.f32 %v80, 1.442695
    %v84 = vpow.pop %v83
    %v85 = vmul.f32 %v81, 1.442695
    %v86 = vpow.pop %v85
    %v87 = vmul.f32 %v82, 1.442695
    %v88 = vpow.pop %v87
    %v89 = vsel %vm69, %v84, 0.0
    %90 = vadd.xlane.f32.xlu0 %v89
    %v91 = vpop.xlane.xlu0 %90
    %v92 = vsel %vm69, %v86, 0.0
    %93 = vadd.xlane.f32.xlu0 %v92
    %v94 = vpop.xlane.xlu0 %93
    %v95 = vsel %vm76, %v88, 0.0
    %96 = vadd.xlane.f32.xlu0 %v95
    %v97 = vpop.xlane.xlu0 %96
    %v98 = vrcp.pop %v91
    %v99 = vmul.f32 1.0, %v98
    %v100 = vrcp.pop %v94
    %v101 = vmul.f32 1.0, %v100
    %v102 = vrcp.pop %v97
    %v103 = vmul.f32 1.0, %v102
    %v104 = vlaneseq
    %v105 = vand.u32 %v104, 127
    %106 = vset.pattern.permute.xlu0 0
    %107 = vperm.xlu0 %106, %v66
    %v108 = vpop.permute.xlu0 %107
    %109 = vset.pattern.permute.xlu0 0
    %110 = vperm.xlu0 %109, %v67
    %v111 = vpop.permute.xlu0 %110
    %112 = vset.pattern.permute.xlu0 0
    %113 = vperm.xlu0 %112, %v68
    %v114 = vpop.permute.xlu0 %113
    %vm115 = vcmp.eq.s32.totalorder %v105, %v108
    %vm116 = vcmp.eq.s32.totalorder %v105, %v111
    %vm117 = vcmp.eq.s32.totalorder %v105, %v114
    %v118 = vsel %vm115, %v80, 0.0
    %v119 = vsel %vm116, %v81, 0.0
    %v120 = vsel %vm117, %v82, 0.0
    %v121 = vsel %vm69, %v118, 0.0
    %122 = vadd.xlane.f32.xlu0 %v121
    %v123 = vpop.xlane.xlu0 %122
    %v124 = vsel %vm69, %v119, 0.0
    %125 = vadd.xlane.f32.xlu0 %v124
    %v126 = vpop.xlane.xlu0 %125
    %v127 = vsel %vm76, %v120, 0.0
    %128 = vadd.xlane.f32.xlu0 %v127
    %v129 = vpop.xlane.xlu0 %128
    %v130 = vlog2.pop %v91
    %v131 = vmul.f32 %v130, 0.6931472
    %v132 = vlog2.pop %v94
    %v133 = vmul.f32 %v132, 0.6931472
    %v134 = vlog2.pop %v97
    %v135 = vmul.f32 %v134, 0.6931472
    %v136 = vsub.f32 %v123, %v131
    %v137 = vsub.f32 %v126, %v133
    %v138 = vsub.f32 %v129, %v135
    %v139 = vmul.f32 %v136, 1.442695
    %v140 = vpow.pop %v139
    %v141 = vmul.f32 %v137, 1.442695
    %v142 = vpow.pop %v141
    %v143 = vmul.f32 %v138, 1.442695
    %v144 = vpow.pop %v143
    %v145 = vsub.f32 1.0, %v140
    %v146 = vsub.f32 1.0, %v142
    %v147 = vsub.f32 1.0, %v144
    %v148 = vmul.f32 %v145, %v136
    %v149 = vmul.f32 %v146, %v137
    %v150 = vmul.f32 %v147, %v138
    %v151 = vsub.f32 0.0, %v148
    %v152 = vsub.f32 0.0, %v149
    %v153 = vsub.f32 0.0, %v150
    %v154 = vld [vmem:[#allocation7] sm:$0x1]
    %v155 = vmul.f32 %v84, %v99
    %v156 = vmul.f32 %v86, %v101
    %v157 = vmul.f32 %v88, %v103
    %v158 = vsel %vm69, %v155, 0.0
    %v159 = vsel %vm69, %v156, 0.0
    %v160 = vadd.f32 %v158, %v159
    %v161 = vsel %vm76, %v157, 0.0
    %v162 = vadd.f32 %v160, %v161
    %v163 = vrot.slane %v162, 4
    %v164 = vadd.f32 %v162, %v163
    %v165 = vrot.slane %v164, 2
    %v166 = vadd.f32 %v164, %v165
    %v167 = vrot.slane %v166, 1
    %v168 = vadd.f32 %v166, %v167
    %v169 = vadd.f32 %v154, %v168
    %vm170 = vcmask 122880
    %171 = vst.msk [vmem:[#allocation7] sm:$0x1] %vm170, %v169
    %v172 = vld [vmem:[#allocation8] sm:$0x1]
    %vm173 = vcmask 7168
    %v174 = vsel %vm173, %v151, 0.0
    %v175 = vsel %vm173, %v152, 0.0
    %v176 = vadd.f32 %v174, %v175
    %vm177 = vcmask 3072
    %v178 = vsel %vm177, %v153, 0.0
    %v179 = vadd.f32 %v176, %v178
    %180 = vadd.xlane.f32.xlu0 %v179
    %v181 = vpop.xlane.xlu0 %180
    %v182 = vrot.slane %v181, 4
    %v183 = vadd.f32 %v181, %v182
    %v184 = vrot.slane %v183, 2
    %v185 = vadd.f32 %v183, %v184
    %v186 = vrot.slane %v185, 1
    %v187 = vadd.f32 %v185, %v186
    %s188 = vtos %v187
    %v189 = vstv %s188
    %v190 = vadd.f32 %v172, %v189
    %vm191 = vcmask 0
    %192 = vst.msk [vmem:[#allocation8] sm:$0x1] %vm191, %v190
    // Predicated region
    $region22: #{tpu_custom_call.1} parent=1 // pred_check
      _
    $region23: #{tpu_custom_call.1} parent=1 // pred_check_branch
      %194 = sbr.rel (0) target = $region25
    $region24: #{tpu_custom_call.1} parent=1 // pred_region
      %s196 = ssub.s32 16, 16
      %197 = vsyncadd [#allocation4], %s196
      %s199 = sshll.u32 [#allocation7], 4
      %s200 = int_to_ptr.vmem [resolvable:$true] %s199
      %202 = dma.vmem_to_hbm [thread:$0]  %s200, 16, %s2, [#allocation4]
    $region25: #{tpu_custom_call.1} parent=1 // pred_fallthru
      _
    // Predicated region
    $region26: #{tpu_custom_call.1} parent=1 // pred_check
      _
    $region27: #{tpu_custom_call.1} parent=1 // pred_check_branch
      %204 = sbr.rel (0) target = $region29
    $region28: #{tpu_custom_call.1} parent=1 // pred_region
      %s206 = ssub.s32 16, 16
      %207 = vsyncadd [#allocation9], %s206
      %s209 = sshll.u32 [#allocation8], 4
      %s210 = int_to_ptr.vmem [resolvable:$true] %s209
      %212 = dma.vmem_to_hbm [thread:$0]  %s210, 16, %s3, [#allocation9]
    $region29: #{tpu_custom_call.1} parent=1 // pred_fallthru
      _
    // Predicated region
    $region30: #{tpu_custom_call.1} parent=1 // pred_check
      _
    $region31: #{tpu_custom_call.1} parent=1 // pred_check_branch
      %214 = sbr.rel (0) target = $region33
    $region32: #{tpu_custom_call.1} parent=1 // pred_region
      %215 = dma.done [#allocation4], 16
    $region33: #{tpu_custom_call.1} parent=1 // pred_fallthru
      _
    // Predicated region
    $region34: #{tpu_custom_call.1} parent=1 // pred_check
      _
    $region35: #{tpu_custom_call.1} parent=1 // pred_check_branch
      %217 = sbr.rel (0) target = $region37
    $region36: #{tpu_custom_call.1} parent=1 // pred_region
      %218 = dma.done [#allocation9], 16
    $region37: #{tpu_custom_call.1} parent=1 // pred_fallthru
      _
    %219 = vsyncpa [#allocation3], 1
    %220 = vsyncpa [#allocation6], 1
    %221 = vsyncpa [#allocation4], 1
    %222 = vsyncpa [#allocation9], 1

</llo_original>
